<compile_context>
chip_gen: v6e
topology: v6e:2x2x1
jax: 0.10.0
libtpu: 0.0.40
codegen_flags: <defaults>
</compile_context>

<pallas_src>
import jax
import jax.numpy as jnp
from jax.experimental import pallas as pl
from jax.experimental.pallas import tpu as pltpu


# ----------------------------------------------------------------------------
# Fused multi-step decode kernel:
#   per grid step t: embedding gather -> all LSTM layers (both dirs) -> linear head
#   hidden/cell carried in the resident output blocks across grid steps.
# ----------------------------------------------------------------------------

def _make_decode_kernel(num_layers, H, B):
    def kernel(tok_ref,                       # SMEM (T, B) int32   (scalar prefetch)
               h0_ref, c0_ref,                # VMEM (B, 2L*H)      initial state slabs
               emb_ref,                       # VMEM (n_chars, 1, 2H) padded embedding
               w_ref,                         # VMEM (L, 4H, 8H)    fused LSTM weights
               b_ref,                         # VMEM (L, 1, 8H)     fused LSTM biases
               w_lin_ref, b_lin_ref,          # VMEM (2H, n_pad), (1, n_pad)
               scale_ref, offset_ref,         # VMEM (1, 8H)        gate activation consts
               pred_ref,                      # VMEM (1, B, n_pad)  per-step logits block
               h_out_ref, c_out_ref):         # VMEM (B, 2L*H)      resident carried state
        t = pl.program_id(0)

        @pl.when(t == 0)
        def _():
            h_out_ref[...] = h0_ref[...]
            c_out_ref[...] = c0_ref[...]

        # In-kernel embedding gather: token ids from SMEM, rows from the VMEM-resident table.
        x = jnp.concatenate([emb_ref[tok_ref[t, b]] for b in range(B)], axis=0)   # (B, 2H)

        scale = scale_ref[...]                 # (1, 8H)
        offset = offset_ref[...]               # (1, 8H)
        h_prev_all = h_out_ref[...]            # (B, 2L*H)  [l0_fwd|l0_rev|l1_fwd|l1_rev]
        c_prev_all = c_out_ref[...]

        layer_in = x                           # (B, 2H)  (layer-0 x is zero-padded to 2H)
        h_parts, c_parts = [], []
        for l in range(num_layers):
            h_prev = h_prev_all[:, l * 2 * H:(l + 1) * 2 * H]    # (B, 2H)  [fwd | rev]
            c_prev = c_prev_all[:, l * 2 * H:(l + 1) * 2 * H]
            z = jnp.concatenate([layer_in, h_prev], axis=1)      # (B, 4H) = (B, 128)
            gates = (jnp.dot(z, w_ref[l], preferred_element_type=jnp.float32)
                     + b_ref[l])                                 # (B, 8H) one MXU pass
            act = jnp.tanh(gates * scale) * scale + offset       # sigmoid(i,f,o), tanh(g)
            i_g = act[:, 0 * 2 * H:1 * 2 * H]
            f_g = act[:, 1 * 2 * H:2 * 2 * H]
            g_g = act[:, 2 * 2 * H:3 * 2 * H]
            o_g = act[:, 3 * 2 * H:4 * 2 * H]
            c_new = f_g * c_prev + i_g * g_g                     # (B, 2H)
            h_new = o_g * jnp.tanh(c_new)                        # (B, 2H) = concat(fwd, rev)
            h_parts.append(h_new)
            c_parts.append(c_new)
            layer_in = h_new

        # Linear head, lane-dense padded output (sliced in the wrapper).
        pred_ref[0] = (jnp.dot(layer_in, w_lin_ref[...], preferred_element_type=jnp.float32)
                       + b_lin_ref[...])
        # Carried state for step t+1 (and the final hidden/cell outputs).
        h_out_ref[...] = jnp.concatenate(h_parts, axis=1)
        c_out_ref[...] = jnp.concatenate(c_parts, axis=1)

    return kernel


# ----------------------------------------------------------------------------
# Multi-step decode (T applications of the module's forward with carried state)
# ----------------------------------------------------------------------------

def _decoder_decode_impl(params, tokens, hidden, cell):
    L, K4, G8 = params["w_fused_stack"].shape            # (num_layers, 4H, 8H)
    H = hidden.shape[-1]
    B = hidden.shape[1]
    T = tokens.shape[0]
    n_chars = params["b_lin"].shape[1]
    n_pad = params["b_lin_pad"].shape[1]
    n_vocab, _, Xp = params["embedding_pad"].shape
    S2 = L * 2 * H                                        # lane-dense state slab width

    # State -> lane-dense slab once per call (not per token).
    h_flat = jnp.transpose(hidden, (1, 0, 2)).reshape(B, S2)
    c_flat = jnp.transpose(cell, (1, 0, 2)).reshape(B, S2)

    const2 = lambda t, tok: (0, 0)
    const3 = lambda t, tok: (0, 0, 0)

    grid_spec = pltpu.PrefetchScalarGridSpec(
        num_scalar_prefetch=1,
        grid=(T,),
        in_specs=[
            pl.BlockSpec((B, S2), const2),                    # h0 slab (read at t==0)
            pl.BlockSpec((B, S2), const2),                    # c0 slab
            pl.BlockSpec((n_vocab, 1, Xp), const3),           # embedding (VMEM-resident)
            pl.BlockSpec((L, K4, G8), const3),                # fused LSTM weights (resident)
            pl.BlockSpec((L, 1, G8), const3),                 # fused LSTM biases
            pl.BlockSpec((2 * H, n_pad), const2),             # linear head W
            pl.BlockSpec((1, n_pad), const2),                 # linear head b
            pl.BlockSpec((1, G8), const2),                    # gate scale
            pl.BlockSpec((1, G8), const2),                    # gate offset
        ],
        out_specs=(
            pl.BlockSpec((1, B, n_pad), lambda t, tok: (t, 0, 0)),   # streamed logits
            pl.BlockSpec((B, S2), const2),                    # carried / final hidden slab
            pl.BlockSpec((B, S2), const2),                    # carried / final cell slab
        ),
    )

    weight_bytes = 4 * (params["w_fused_stack"].size + params["b_fused_stack"].size
                        + params["w_lin_pad"].size + params["b_lin_pad"].size
                        + params["embedding_pad"].size)
    cost = pl.CostEstimate(
        flops=T * (2 * B * K4 * G8 * L + 2 * B * 2 * H * n_pad),
        transcendentals=T * B * (G8 + 2 * H) * L,
        bytes_accessed=weight_bytes + T * B * (n_pad + 1) * 4 + 4 * B * S2 * 4,
    )

    preds_pad, h_out, c_out = pl.pallas_call(
        _make_decode_kernel(L, H, B),
        grid_spec=grid_spec,
        out_shape=(jax.ShapeDtypeStruct((T, B, n_pad), jnp.float32),
                   jax.ShapeDtypeStruct((B, S2), jnp.float32),
                   jax.ShapeDtypeStruct((B, S2), jnp.float32)),
        compiler_params=pltpu.CompilerParams(
            dimension_semantics=("arbitrary",),      # token axis is sequentially dependent
            vmem_limit_bytes=8 * 1024 * 1024),
        cost_estimate=cost,
    )(tokens, h_flat, c_flat,
      params["embedding_pad"], params["w_fused_stack"], params["b_fused_stack"],
      params["w_lin_pad"], params["b_lin_pad"],
      params["gate_scale"], params["gate_offset"])

    preds = preds_pad[:, :, :n_chars]
    hidden_out = h_out.reshape(B, L * 2, H).transpose(1, 0, 2)
    cell_out = c_out.reshape(B, L * 2, H).transpose(1, 0, 2)
    # self.dropout is never applied in the reference forward -> no-op.
    return preds, hidden_out, cell_out


decoder_decode = jax.jit(_decoder_decode_impl)


def decoder_forward(params, x_tokens, hidden, cell):
    """Single-step forward == the PyTorch module's forward (x: (B,) token ids)."""
    preds, hidden_out, cell_out = decoder_decode(params, x_tokens[None, :], hidden, cell)
    return preds[0], hidden_out, cell_out


# ----------------------------------------------------------------------------
# Pure-JAX reference (raw per-direction weights, same math, no Pallas)
# ----------------------------------------------------------------------------

def decoder_step_ref(params, x_tokens, hidden, cell):
    num_layers = len(params["w_ih_t"]) // 2
    H = hidden.shape[-1]
    layer_in = params["embedding"][x_tokens]
    new_h, new_c = [], []
    for l in range(num_layers):
        dir_outs = []
        for d in range(2):
            idx = l * 2 + d
            gates = (layer_in @ params["w_ih_t"][idx]
                     + hidden[idx] @ params["w_hh_t"][idx]
                     + params["b"][idx])
            i = jax.nn.sigmoid(gates[:, 0 * H:1 * H])
            f = jax.nn.sigmoid(gates[:, 1 * H:2 * H])
            g = jnp.tanh(gates[:, 2 * H:3 * H])
            o = jax.nn.sigmoid(gates[:, 3 * H:4 * H])
            c_new = f * cell[idx] + i * g
            h_new = o * jnp.tanh(c_new)
            new_h.append(h_new)
            new_c.append(c_new)
            dir_outs.append(h_new)
        layer_in = jnp.concatenate(dir_outs, axis=-1)
    pred = layer_in @ params["w_lin_t"] + params["b_lin"]
    return pred, jnp.stack(new_h, 0), jnp.stack(new_c, 0)


def decoder_decode_ref(params, tokens, hidden, cell):
    preds = []
    for t in range(tokens.shape[0]):
        p, hidden, cell = decoder_step_ref(params, tokens[t], hidden, cell)
        preds.append(p)
    return jnp.stack(preds, 0), hidden, cell


# ----------------------------------------------------------------------------
# Deterministic parameter construction (nn.Embedding / nn.LSTM / nn.Linear shapes)
# ----------------------------------------------------------------------------

def make_params(key, n_chars, embed_dim, hidden_size, num_layers):
    H = hidden_size
    Xp = 2 * H                                  # uniform per-layer x width (layer 0 zero-padded)
    assert embed_dim <= Xp, "embed_dim must fit in the padded K=4H layout"
    assert (8 * H) % 128 == 0, "gate slab (8H) must be lane-dense (multiple of 128)"
    assert (num_layers * 2 * H) % 128 == 0, "state slab must be lane-dense (multiple of 128)"
    scale = 1.0 / jnp.sqrt(hidden_size)

    def u(k, shape):
        return jax.random.uniform(k, shape, jnp.float32, -scale, scale)

    keys = iter(jax.random.split(key, 4 + num_layers * 2 * 4 + 2))

    params = {
        "embedding": jax.random.normal(next(keys), (n_chars, embed_dim), jnp.float32),
        # raw per-direction weights (reference path)
        "w_ih_t": [], "w_hh_t": [], "b": [],
    }

    w_layers, b_layers = [], []
    for l in range(num_layers):
        in_dim = embed_dim if l == 0 else 2 * H
        raw = []
        for _ in range(2):  # forward / reverse direction
            w_ih = u(next(keys), (4 * H, in_dim))        # PyTorch weight_ih_l{l}[_reverse]
            w_hh = u(next(keys), (4 * H, H))             # PyTorch weight_hh_l{l}[_reverse]
            b_ih = u(next(keys), (4 * H,))
            b_hh = u(next(keys), (4 * H,))
            w_ih_t, w_hh_t = w_ih.T, w_hh.T              # (in_dim, 4H), (H, 4H)
            b = (b_ih + b_hh).reshape(1, -1)             # (1, 4H)
            params["w_ih_t"].append(w_ih_t)
            params["w_hh_t"].append(w_hh_t)
            params["b"].append(b)
            raw.append((w_ih_t, w_hh_t, b))

        # One (4H, 8H) = (128, 256) matrix per layer: both directions, x-path + h-path,
        # x rows zero-padded to Xp=2H so K is uniformly 128 (one clean MXU contraction).
        # Column layout is gate-major / direction-minor:
        #   cols [g*2H + d*H : g*2H + (d+1)*H] = gate g (i,f,g,o) of direction d (fwd,rev).
        W = jnp.zeros((Xp + 2 * H, 8 * H), jnp.float32)
        bias = jnp.zeros((1, 8 * H), jnp.float32)
        for d, (w_ih_t, w_hh_t, b) in enumerate(raw):
            for g in range(4):
                col = g * 2 * H + d * H
                W = W.at[:in_dim, col:col + H].set(w_ih_t[:, g * H:(g + 1) * H])
                W = W.at[Xp + d * H:Xp + (d + 1) * H, col:col + H].set(
                    w_hh_t[:, g * H:(g + 1) * H])
                bias = bias.at[0, col:col + H].set(b[0, g * H:(g + 1) * H])
        w_layers.append(W)
        b_layers.append(bias)
    params["w_fused_stack"] = jnp.stack(w_layers, 0)      # (L, 4H, 8H)
    params["b_fused_stack"] = jnp.stack(b_layers, 0)      # (L, 1, 8H)

    # Embedding zero-padded to the uniform x width, shaped for dynamic row loads in-kernel.
    params["embedding_pad"] = (jnp.zeros((n_chars, 1, Xp), jnp.float32)
                               .at[:, 0, :embed_dim].set(params["embedding"]))

    w_lin = u(next(keys), (n_chars, 2 * H))               # nn.Linear(2H, n_chars)
    b_lin = u(next(keys), (n_chars,))
    params["w_lin_t"] = w_lin.T                           # (2H, n_chars) — reference path
    params["b_lin"] = b_lin.reshape(1, -1)                # (1, n_chars)
    n_pad = ((n_chars + 127) // 128) * 128                # 128-lane-dense head output
    params["w_lin_pad"] = jnp.zeros((2 * H, n_pad), jnp.float32).at[:, :n_chars].set(w_lin.T)
    params["b_lin_pad"] = jnp.zeros((1, n_pad), jnp.float32).at[0, :n_chars].set(b_lin)

    # Hoisted gate-activation constants: sigmoid(x)=0.5*tanh(0.5x)+0.5 on i/f/o columns,
    # plain tanh on g columns (matching the gate-major column layout above).
    col = jnp.arange(8 * H)
    is_g = (col >= 4 * H) & (col < 6 * H)
    params["gate_scale"] = jnp.where(is_g, 1.0, 0.5).astype(jnp.float32).reshape(1, -1)
    params["gate_offset"] = jnp.where(is_g, 0.0, 0.5).astype(jnp.float32).reshape(1, -1)
    return params


# ----------------------------------------------------------------------------
# Main
# ----------------------------------------------------------------------------

if __name__ == "__main__":
    n_chars, embed_dim, hidden_size, num_layers = 32, 16, 32, 2
    batch, seq_len = 8, 8

    root = jax.random.PRNGKey(0)
    k_par, k_tok, k_h, k_c = jax.random.split(root, 4)

    params = make_params(k_par, n_chars, embed_dim, hidden_size, num_layers)

    tokens = jax.random.randint(k_tok, (seq_len, batch), 0, n_chars, jnp.int32)
    hidden0 = jax.random.normal(k_h, (num_layers * 2, batch, hidden_size), jnp.float32)
    cell0 = jax.random.normal(k_c, (num_layers * 2, batch, hidden_size), jnp.float32)

    # Multi-step fused decode (token loop inside the kernel, weights VMEM-resident).
    preds, hidden1, cell1 = decoder_decode(params, tokens, hidden0, cell0)
    jax.block_until_ready((preds, hidden1, cell1))

    # Single-step call == the PyTorch module's forward semantics.
    pred1, h1, c1 = decoder_forward(params, tokens[0], hidden0, cell0)
    jax.block_until_ready((pred1, h1, c1))

    # Correctness vs pure-JAX reference.
    preds_r, hidden_r, cell_r = decoder_decode_ref(params, tokens, hidden0, cell0)
    assert preds.shape == (seq_len, batch, n_chars)
    assert hidden1.shape == (num_layers * 2, batch, hidden_size)
    assert cell1.shape == (num_layers * 2, batch, hidden_size)
    assert jnp.allclose(preds, preds_r, atol=1e-4, rtol=1e-4)
    assert jnp.allclose(hidden1, hidden_r, atol=1e-4, rtol=1e-4)
    assert jnp.allclose(cell1, cell_r, atol=1e-4, rtol=1e-4)

    pred1_r, h1_r, c1_r = decoder_step_ref(params, tokens[0], hidden0, cell0)
    assert pred1.shape == (batch, n_chars)
    assert jnp.allclose(pred1, pred1_r, atol=1e-4, rtol=1e-4)
    assert jnp.allclose(h1, h1_r, atol=1e-4, rtol=1e-4)
    assert jnp.allclose(c1, c1_r, atol=1e-4, rtol=1e-4)

    print("KERNEL_OK")
</pallas_src>

<mosaic_0001>
module attributes {stable_mosaic.version = 11 : i64} {
  func.func @kernel(%arg0: i32, %arg1: memref<8x8xi32, #tpu.memory_space<smem>>, %arg2: memref<8x128xf32, #tpu.memory_space<vmem>>, %arg3: memref<8x128xf32, #tpu.memory_space<vmem>>, %arg4: memref<32x1x64xf32, #tpu.memory_space<vmem>>, %arg5: memref<2x128x256xf32, #tpu.memory_space<vmem>>, %arg6: memref<2x1x256xf32, #tpu.memory_space<vmem>>, %arg7: memref<64x128xf32, #tpu.memory_space<vmem>>, %arg8: memref<1x128xf32, #tpu.memory_space<vmem>>, %arg9: memref<1x256xf32, #tpu.memory_space<vmem>>, %arg10: memref<1x256xf32, #tpu.memory_space<vmem>>, %arg11: memref<1x8x128xf32, #tpu.memory_space<vmem>>, %arg12: memref<8x128xf32, #tpu.memory_space<vmem>>, %arg13: memref<8x128xf32, #tpu.memory_space<vmem>>) attributes {dimension_semantics = [#tpu.dimension_semantics<arbitrary>], iteration_bounds = array<i64: 8>, scalar_prefetch = 1 : i64, scratch_operands = 0 : i64, tpu.core_type = #tpu.core_type<tc>, window_params = [{pipeline_mode = #tpu.pipeline_mode<synchronous>, transform_indices = @transform_0, window_bounds = array<i64: 8, 128>}, {pipeline_mode = #tpu.pipeline_mode<synchronous>, transform_indices = @transform_1, window_bounds = array<i64: 8, 128>}, {pipeline_mode = #tpu.pipeline_mode<synchronous>, transform_indices = @transform_2, window_bounds = array<i64: 32, 1, 64>}, {pipeline_mode = #tpu.pipeline_mode<synchronous>, transform_indices = @transform_3, window_bounds = array<i64: 2, 128, 256>}, {pipeline_mode = #tpu.pipeline_mode<synchronous>, transform_indices = @transform_4, window_bounds = array<i64: 2, 1, 256>}, {pipeline_mode = #tpu.pipeline_mode<synchronous>, transform_indices = @transform_5, window_bounds = array<i64: 64, 128>}, {pipeline_mode = #tpu.pipeline_mode<synchronous>, transform_indices = @transform_6, window_bounds = array<i64: 1, 128>}, {pipeline_mode = #tpu.pipeline_mode<synchronous>, transform_indices = @transform_7, window_bounds = array<i64: 1, 256>}, {pipeline_mode = #tpu.pipeline_mode<synchronous>, transform_indices = @transform_8, window_bounds = array<i64: 1, 256>}, {transform_indices = @transform_9, window_bounds = array<i64: 1, 8, 128>}, {pipeline_mode = #tpu.pipeline_mode<synchronous>, transform_indices = @transform_10, window_bounds = array<i64: 8, 128>}, {pipeline_mode = #tpu.pipeline_mode<synchronous>, transform_indices = @transform_11, window_bounds = array<i64: 8, 128>}]} {
    %c0_i32 = arith.constant 0 : i32
    %0 = arith.cmpi eq, %arg0, %c0_i32 : i32
    %1 = arith.extui %0 : i1 to i32
    %c0_i32_0 = arith.constant 0 : i32
    %2 = arith.cmpi ne, %1, %c0_i32_0 : i32
    scf.if %2 {
      %c0_50 = arith.constant 0 : index
      %c0_51 = arith.constant 0 : index
      %112 = vector.load %arg2[%c0_50, %c0_51] : memref<8x128xf32, #tpu.memory_space<vmem>>, vector<8x128xf32>
      %c0_52 = arith.constant 0 : index
      %c0_53 = arith.constant 0 : index
      %113 = vector.load %arg12[%c0_52, %c0_53] : memref<8x128xf32, #tpu.memory_space<vmem>>, vector<8x128xf32>
      tpu.vector_store %arg12[%c0_52, %c0_53], %112 {strides = array<i32>} : memref<8x128xf32, #tpu.memory_space<vmem>>, vector<8x128xf32>,
      %c0_54 = arith.constant 0 : index
      %c0_55 = arith.constant 0 : index
      %114 = vector.load %arg3[%c0_54, %c0_55] : memref<8x128xf32, #tpu.memory_space<vmem>>, vector<8x128xf32>
      %c0_56 = arith.constant 0 : index
      %c0_57 = arith.constant 0 : index
      %115 = vector.load %arg13[%c0_56, %c0_57] : memref<8x128xf32, #tpu.memory_space<vmem>>, vector<8x128xf32>
      tpu.vector_store %arg13[%c0_56, %c0_57], %114 {strides = array<i32>} : memref<8x128xf32, #tpu.memory_space<vmem>>, vector<8x128xf32>,
    } else {
    }
    %3 = arith.index_cast %arg0 : i32 to index
    %c0 = arith.constant 0 : index
    %4 = memref.load %arg1[%3, %c0] : memref<8x8xi32, #tpu.memory_space<smem>>
    %5 = arith.index_cast %4 : i32 to index
    %c0_1 = arith.constant 0 : index
    %c0_2 = arith.constant 0 : index
    %6 = vector.load %arg4[%5, %c0_1, %c0_2] : memref<32x1x64xf32, #tpu.memory_space<vmem>>, vector<1x1x64xf32>
    %7 = vector.shape_cast %6 : vector<1x1x64xf32> to vector<1x64xf32>
    %8 = arith.index_cast %arg0 : i32 to index
    %c1 = arith.constant 1 : index
    %9 = memref.load %arg1[%8, %c1] : memref<8x8xi32, #tpu.memory_space<smem>>
    %10 = arith.index_cast %9 : i32 to index
    %c0_3 = arith.constant 0 : index
    %c0_4 = arith.constant 0 : index
    %11 = vector.load %arg4[%10, %c0_3, %c0_4] : memref<32x1x64xf32, #tpu.memory_space<vmem>>, vector<1x1x64xf32>
    %12 = vector.shape_cast %11 : vector<1x1x64xf32> to vector<1x64xf32>
    %13 = arith.index_cast %arg0 : i32 to index
    %c2 = arith.constant 2 : index
    %14 = memref.load %arg1[%13, %c2] : memref<8x8xi32, #tpu.memory_space<smem>>
    %15 = arith.index_cast %14 : i32 to index
    %c0_5 = arith.constant 0 : index
    %c0_6 = arith.constant 0 : index
    %16 = vector.load %arg4[%15, %c0_5, %c0_6] : memref<32x1x64xf32, #tpu.memory_space<vmem>>, vector<1x1x64xf32>
    %17 = vector.shape_cast %16 : vector<1x1x64xf32> to vector<1x64xf32>
    %18 = arith.index_cast %arg0 : i32 to index
    %c3 = arith.constant 3 : index
    %19 = memref.load %arg1[%18, %c3] : memref<8x8xi32, #tpu.memory_space<smem>>
    %20 = arith.index_cast %19 : i32 to index
    %c0_7 = arith.constant 0 : index
    %c0_8 = arith.constant 0 : index
    %21 = vector.load %arg4[%20, %c0_7, %c0_8] : memref<32x1x64xf32, #tpu.memory_space<vmem>>, vector<1x1x64xf32>
    %22 = vector.shape_cast %21 : vector<1x1x64xf32> to vector<1x64xf32>
    %23 = arith.index_cast %arg0 : i32 to index
    %c4 = arith.constant 4 : index
    %24 = memref.load %arg1[%23, %c4] : memref<8x8xi32, #tpu.memory_space<smem>>
    %25 = arith.index_cast %24 : i32 to index
    %c0_9 = arith.constant 0 : index
    %c0_10 = arith.constant 0 : index
    %26 = vector.load %arg4[%25, %c0_9, %c0_10] : memref<32x1x64xf32, #tpu.memory_space<vmem>>, vector<1x1x64xf32>
    %27 = vector.shape_cast %26 : vector<1x1x64xf32> to vector<1x64xf32>
    %28 = arith.index_cast %arg0 : i32 to index
    %c5 = arith.constant 5 : index
    %29 = memref.load %arg1[%28, %c5] : memref<8x8xi32, #tpu.memory_space<smem>>
    %30 = arith.index_cast %29 : i32 to index
    %c0_11 = arith.constant 0 : index
    %c0_12 = arith.constant 0 : index
    %31 = vector.load %arg4[%30, %c0_11, %c0_12] : memref<32x1x64xf32, #tpu.memory_space<vmem>>, vector<1x1x64xf32>
    %32 = vector.shape_cast %31 : vector<1x1x64xf32> to vector<1x64xf32>
    %33 = arith.index_cast %arg0 : i32 to index
    %c6 = arith.constant 6 : index
    %34 = memref.load %arg1[%33, %c6] : memref<8x8xi32, #tpu.memory_space<smem>>
    %35 = arith.index_cast %34 : i32 to index
    %c0_13 = arith.constant 0 : index
    %c0_14 = arith.constant 0 : index
    %36 = vector.load %arg4[%35, %c0_13, %c0_14] : memref<32x1x64xf32, #tpu.memory_space<vmem>>, vector<1x1x64xf32>
    %37 = vector.shape_cast %36 : vector<1x1x64xf32> to vector<1x64xf32>
    %38 = arith.index_cast %arg0 : i32 to index
    %c7 = arith.constant 7 : index
    %39 = memref.load %arg1[%38, %c7] : memref<8x8xi32, #tpu.memory_space<smem>>
    %40 = arith.index_cast %39 : i32 to index
    %c0_15 = arith.constant 0 : index
    %c0_16 = arith.constant 0 : index
    %41 = vector.load %arg4[%40, %c0_15, %c0_16] : memref<32x1x64xf32, #tpu.memory_space<vmem>>, vector<1x1x64xf32>
    %42 = vector.shape_cast %41 : vector<1x1x64xf32> to vector<1x64xf32>
    %43 = tpu.concatenate %7, %12, %17, %22, %27, %32, %37, %42 in 0 : vector<1x64xf32>, vector<1x64xf32>, vector<1x64xf32>, vector<1x64xf32>, vector<1x64xf32>, vector<1x64xf32>, vector<1x64xf32>, vector<1x64xf32> -> vector<8x64xf32>
    %c0_17 = arith.constant 0 : index
    %c0_18 = arith.constant 0 : index
    %44 = vector.load %arg9[%c0_17, %c0_18] : memref<1x256xf32, #tpu.memory_space<vmem>>, vector<1x256xf32>
    %c0_19 = arith.constant 0 : index
    %c0_20 = arith.constant 0 : index
    %45 = vector.load %arg10[%c0_19, %c0_20] : memref<1x256xf32, #tpu.memory_space<vmem>>, vector<1x256xf32>
    %c0_21 = arith.constant 0 : index
    %c0_22 = arith.constant 0 : index
    %46 = vector.load %arg12[%c0_21, %c0_22] : memref<8x128xf32, #tpu.memory_space<vmem>>, vector<8x128xf32>
    %c0_23 = arith.constant 0 : index
    %c0_24 = arith.constant 0 : index
    %47 = vector.load %arg13[%c0_23, %c0_24] : memref<8x128xf32, #tpu.memory_space<vmem>>, vector<8x128xf32>
    %48 = vector.extract_strided_slice %46 {offsets = [0, 0], sizes = [8, 64], strides = [1, 1]} : vector<8x128xf32> to vector<8x64xf32>
    %49 = vector.extract_strided_slice %47 {offsets = [0, 0], sizes = [8, 64], strides = [1, 1]} : vector<8x128xf32> to vector<8x64xf32>
    %50 = tpu.concatenate %43, %48 in 1 : vector<8x64xf32>, vector<8x64xf32> -> vector<8x128xf32>
    %c0_25 = arith.constant 0 : index
    %c0_26 = arith.constant 0 : index
    %c0_27 = arith.constant 0 : index
    %51 = vector.load %arg5[%c0_25, %c0_26, %c0_27] : memref<2x128x256xf32, #tpu.memory_space<vmem>>, vector<1x128x256xf32>
    %52 = vector.shape_cast %51 : vector<1x128x256xf32> to vector<128x256xf32>
    %cst = arith.constant dense<0.000000e+00> : vector<8x256xf32>
    %53 = tpu.matmul %50, %52, %cst {dimension_numbers = #tpu.dot_dimension_numbers<[1], [0], [0], [1], [0, 0, 1, 1], [], []>} : vector<8x128xf32>, vector<128x256xf32>, vector<8x256xf32> -> vector<8x256xf32>
    %c0_28 = arith.constant 0 : index
    %c0_29 = arith.constant 0 : index
    %c0_30 = arith.constant 0 : index
    %54 = vector.load %arg6[%c0_28, %c0_29, %c0_30] : memref<2x1x256xf32, #tpu.memory_space<vmem>>, vector<1x1x256xf32>
    %55 = vector.shape_cast %54 : vector<1x1x256xf32> to vector<1x256xf32>
    %56 = vector.broadcast %55 : vector<1x256xf32> to vector<8x256xf32>
    %57 = arith.addf %53, %56 : vector<8x256xf32>
    %58 = vector.broadcast %44 : vector<1x256xf32> to vector<8x256xf32>
    %59 = arith.mulf %57, %58 : vector<8x256xf32>
    %60 = math.tanh %59 : vector<8x256xf32>
    %61 = vector.broadcast %44 : vector<1x256xf32> to vector<8x256xf32>
    %62 = arith.mulf %60, %61 : vector<8x256xf32>
    %63 = vector.broadcast %45 : vector<1x256xf32> to vector<8x256xf32>
    %64 = arith.addf %62, %63 : vector<8x256xf32>
    %65 = vector.extract_strided_slice %64 {offsets = [0, 0], sizes = [8, 64], strides = [1, 1]} : vector<8x256xf32> to vector<8x64xf32>
    %66 = vector.extract_strided_slice %64 {offsets = [0, 64], sizes = [8, 64], strides = [1, 1]} : vector<8x256xf32> to vector<8x64xf32>
    %67 = vector.extract_strided_slice %64 {offsets = [0, 128], sizes = [8, 64], strides = [1, 1]} : vector<8x256xf32> to vector<8x64xf32>
    %68 = vector.extract_strided_slice %64 {offsets = [0, 192], sizes = [8, 64], strides = [1, 1]} : vector<8x256xf32> to vector<8x64xf32>
    %69 = arith.mulf %66, %49 : vector<8x64xf32>
    %70 = arith.mulf %65, %67 : vector<8x64xf32>
    %71 = arith.addf %69, %70 : vector<8x64xf32>
    %72 = math.tanh %71 : vector<8x64xf32>
    %73 = arith.mulf %68, %72 : vector<8x64xf32>
    %74 = vector.extract_strided_slice %46 {offsets = [0, 64], sizes = [8, 64], strides = [1, 1]} : vector<8x128xf32> to vector<8x64xf32>
    %75 = vector.extract_strided_slice %47 {offsets = [0, 64], sizes = [8, 64], strides = [1, 1]} : vector<8x128xf32> to vector<8x64xf32>
    %76 = tpu.concatenate %73, %74 in 1 : vector<8x64xf32>, vector<8x64xf32> -> vector<8x128xf32>
    %c1_31 = arith.constant 1 : index
    %c0_32 = arith.constant 0 : index
    %c0_33 = arith.constant 0 : index
    %77 = vector.load %arg5[%c1_31, %c0_32, %c0_33] : memref<2x128x256xf32, #tpu.memory_space<vmem>>, vector<1x128x256xf32>
    %78 = vector.shape_cast %77 : vector<1x128x256xf32> to vector<128x256xf32>
    %cst_34 = arith.constant dense<0.000000e+00> : vector<8x256xf32>
    %79 = tpu.matmul %76, %78, %cst_34 {dimension_numbers = #tpu.dot_dimension_numbers<[1], [0], [0], [1], [0, 0, 1, 1], [], []>} : vector<8x128xf32>, vector<128x256xf32>, vector<8x256xf32> -> vector<8x256xf32>
    %c1_35 = arith.constant 1 : index
    %c0_36 = arith.constant 0 : index
    %c0_37 = arith.constant 0 : index
    %80 = vector.load %arg6[%c1_35, %c0_36, %c0_37] : memref<2x1x256xf32, #tpu.memory_space<vmem>>, vector<1x1x256xf32>
    %81 = vector.shape_cast %80 : vector<1x1x256xf32> to vector<1x256xf32>
    %82 = vector.broadcast %81 : vector<1x256xf32> to vector<8x256xf32>
    %83 = arith.addf %79, %82 : vector<8x256xf32>
    %84 = vector.broadcast %44 : vector<1x256xf32> to vector<8x256xf32>
    %85 = arith.mulf %83, %84 : vector<8x256xf32>
    %86 = math.tanh %85 : vector<8x256xf32>
    %87 = vector.broadcast %44 : vector<1x256xf32> to vector<8x256xf32>
    %88 = arith.mulf %86, %87 : vector<8x256xf32>
    %89 = vector.broadcast %45 : vector<1x256xf32> to vector<8x256xf32>
    %90 = arith.addf %88, %89 : vector<8x256xf32>
    %91 = vector.extract_strided_slice %90 {offsets = [0, 0], sizes = [8, 64], strides = [1, 1]} : vector<8x256xf32> to vector<8x64xf32>
    %92 = vector.extract_strided_slice %90 {offsets = [0, 64], sizes = [8, 64], strides = [1, 1]} : vector<8x256xf32> to vector<8x64xf32>
    %93 = vector.extract_strided_slice %90 {offsets = [0, 128], sizes = [8, 64], strides = [1, 1]} : vector<8x256xf32> to vector<8x64xf32>
    %94 = vector.extract_strided_slice %90 {offsets = [0, 192], sizes = [8, 64], strides = [1, 1]} : vector<8x256xf32> to vector<8x64xf32>
    %95 = arith.mulf %92, %75 : vector<8x64xf32>
    %96 = arith.mulf %91, %93 : vector<8x64xf32>
    %97 = arith.addf %95, %96 : vector<8x64xf32>
    %98 = math.tanh %97 : vector<8x64xf32>
    %99 = arith.mulf %94, %98 : vector<8x64xf32>
    %c0_38 = arith.constant 0 : index
    %c0_39 = arith.constant 0 : index
    %100 = vector.load %arg7[%c0_38, %c0_39] : memref<64x128xf32, #tpu.memory_space<vmem>>, vector<64x128xf32>
    %cst_40 = arith.constant dense<0.000000e+00> : vector<8x128xf32>
    %101 = tpu.matmul %99, %100, %cst_40 {dimension_numbers = #tpu.dot_dimension_numbers<[1], [0], [0], [1], [0, 0, 1, 1], [], []>} : vector<8x64xf32>, vector<64x128xf32>, vector<8x128xf32> -> vector<8x128xf32>
    %c0_41 = arith.constant 0 : index
    %c0_42 = arith.constant 0 : index
    %102 = vector.load %arg8[%c0_41, %c0_42] : memref<1x128xf32, #tpu.memory_space<vmem>>, vector<1x128xf32>
    %103 = vector.broadcast %102 : vector<1x128xf32> to vector<8x128xf32>
    %104 = arith.addf %101, %103 : vector<8x128xf32>
    %c0_43 = arith.constant 0 : index
    %c0_44 = arith.constant 0 : index
    %c0_45 = arith.constant 0 : index
    %105 = vector.load %arg11[%c0_43, %c0_44, %c0_45] : memref<1x8x128xf32, #tpu.memory_space<vmem>>, vector<1x8x128xf32>
    %106 = vector.shape_cast %105 : vector<1x8x128xf32> to vector<8x128xf32>
    %107 = vector.shape_cast %104 : vector<8x128xf32> to vector<1x8x128xf32>
    tpu.vector_store %arg11[%c0_43, %c0_44, %c0_45], %107 {strides = array<i32>} : memref<1x8x128xf32, #tpu.memory_space<vmem>>, vector<1x8x128xf32>,
    %108 = tpu.concatenate %73, %99 in 1 : vector<8x64xf32>, vector<8x64xf32> -> vector<8x128xf32>
    %c0_46 = arith.constant 0 : index
    %c0_47 = arith.constant 0 : index
    %109 = vector.load %arg12[%c0_46, %c0_47] : memref<8x128xf32, #tpu.memory_space<vmem>>, vector<8x128xf32>
    tpu.vector_store %arg12[%c0_46, %c0_47], %108 {strides = array<i32>} : memref<8x128xf32, #tpu.memory_space<vmem>>, vector<8x128xf32>,
    %110 = tpu.concatenate %71, %97 in 1 : vector<8x64xf32>, vector<8x64xf32> -> vector<8x128xf32>
    %c0_48 = arith.constant 0 : index
    %c0_49 = arith.constant 0 : index
    %111 = vector.load %arg13[%c0_48, %c0_49] : memref<8x128xf32, #tpu.memory_space<vmem>>, vector<8x128xf32>
    tpu.vector_store %arg13[%c0_48, %c0_49], %110 {strides = array<i32>} : memref<8x128xf32, #tpu.memory_space<vmem>>, vector<8x128xf32>,
    return
  }
  func.func @transform_0(%arg0: i32, %arg1: memref<8x8xi32, #tpu.memory_space<smem>>) -> (i32, i32) {
    %c0_i32 = arith.constant 0 : i32
    %c0_i32_0 = arith.constant 0 : i32
    %c0_i32_1 = arith.constant 0 : i32
    return %c0_i32, %c0_i32_0 : i32, i32
  }
  func.func @transform_1(%arg0: i32, %arg1: memref<8x8xi32, #tpu.memory_space<smem>>) -> (i32, i32) {
    %c0_i32 = arith.constant 0 : i32
    %c0_i32_0 = arith.constant 0 : i32
    %c0_i32_1 = arith.constant 0 : i32
    return %c0_i32, %c0_i32_0 : i32, i32
  }
  func.func @transform_2(%arg0: i32, %arg1: memref<8x8xi32, #tpu.memory_space<smem>>) -> (i32, i32, i32) {
    %c0_i32 = arith.constant 0 : i32
    %c0_i32_0 = arith.constant 0 : i32
    %c0_i32_1 = arith.constant 0 : i32
    %c0_i32_2 = arith.constant 0 : i32
    return %c0_i32, %c0_i32_0, %c0_i32_1 : i32, i32, i32
  }
  func.func @transform_3(%arg0: i32, %arg1: memref<8x8xi32, #tpu.memory_space<smem>>) -> (i32, i32, i32) {
    %c0_i32 = arith.constant 0 : i32
    %c0_i32_0 = arith.constant 0 : i32
    %c0_i32_1 = arith.constant 0 : i32
    %c0_i32_2 = arith.constant 0 : i32
    return %c0_i32, %c0_i32_0, %c0_i32_1 : i32, i32, i32
  }
  func.func @transform_4(%arg0: i32, %arg1: memref<8x8xi32, #tpu.memory_space<smem>>) -> (i32, i32, i32) {
    %c0_i32 = arith.constant 0 : i32
    %c0_i32_0 = arith.constant 0 : i32
    %c0_i32_1 = arith.constant 0 : i32
    %c0_i32_2 = arith.constant 0 : i32
    return %c0_i32, %c0_i32_0, %c0_i32_1 : i32, i32, i32
  }
  func.func @transform_5(%arg0: i32, %arg1: memref<8x8xi32, #tpu.memory_space<smem>>) -> (i32, i32) {
    %c0_i32 = arith.constant 0 : i32
    %c0_i32_0 = arith.constant 0 : i32
    %c0_i32_1 = arith.constant 0 : i32
    return %c0_i32, %c0_i32_0 : i32, i32
  }
  func.func @transform_6(%arg0: i32, %arg1: memref<8x8xi32, #tpu.memory_space<smem>>) -> (i32, i32) {
    %c0_i32 = arith.constant 0 : i32
    %c0_i32_0 = arith.constant 0 : i32
    %c0_i32_1 = arith.constant 0 : i32
    return %c0_i32, %c0_i32_0 : i32, i32
  }
  func.func @transform_7(%arg0: i32, %arg1: memref<8x8xi32, #tpu.memory_space<smem>>) -> (i32, i32) {
    %c0_i32 = arith.constant 0 : i32
    %c0_i32_0 = arith.constant 0 : i32
    %c0_i32_1 = arith.constant 0 : i32
    return %c0_i32, %c0_i32_0 : i32, i32
  }
  func.func @transform_8(%arg0: i32, %arg1: memref<8x8xi32, #tpu.memory_space<smem>>) -> (i32, i32) {
    %c0_i32 = arith.constant 0 : i32
    %c0_i32_0 = arith.constant 0 : i32
    %c0_i32_1 = arith.constant 0 : i32
    return %c0_i32, %c0_i32_0 : i32, i32
  }
  func.func @transform_9(%arg0: i32, %arg1: memref<8x8xi32, #tpu.memory_space<smem>>) -> (i32, i32, i32) {
    %c0_i32 = arith.constant 0 : i32
    %c0_i32_0 = arith.constant 0 : i32
    %c0_i32_1 = arith.constant 0 : i32
    return %arg0, %c0_i32, %c0_i32_0 : i32, i32, i32
  }
  func.func @transform_10(%arg0: i32, %arg1: memref<8x8xi32, #tpu.memory_space<smem>>) -> (i32, i32) {
    %c0_i32 = arith.constant 0 : i32
    %c0_i32_0 = arith.constant 0 : i32
    %c0_i32_1 = arith.constant 0 : i32
    return %c0_i32, %c0_i32_0 : i32, i32
  }
  func.func @transform_11(%arg0: i32, %arg1: memref<8x8xi32, #tpu.memory_space<smem>>) -> (i32, i32) {
    %c0_i32 = arith.constant 0 : i32
    %c0_i32_0 = arith.constant 0 : i32
    %c0_i32_1 = arith.constant 0 : i32
    return %c0_i32, %c0_i32_0 : i32, i32
  }
}

</mosaic_0001>

<llo_original>
// kernel: _decoder_decode_impl.1
$region0: #{_decoder_decode_impl.1}
  #allocation0 [shape = 'u32[]', space=smem, size = 0x4, offset = 0x4, fixed_abs, tag = 'smem constant byte address 0x4 - core index']
  #allocation1 [shape = 'u32[144,128]{1,0:T(1,128)}', space=vmem, size = 0x12000, scoped, tag = 'internal scratch']
  #allocation2 [shape = 's32[1]{0}', space=sflag, size = 0x4, scoped, tag = 'scoped memory for _decoder_decode_impl.1']
  #allocation3 [shape = 'u8[4096]{0}', space=smem, size = 0x1000, scoped, tag = 'prefetched SMEM operand 0']
  %s0 = inlined_call_operand.vmem [shape: s32[8,8], index: 0, kind: input, shape index: {}]
  %s1 = inlined_call_operand.vmem [shape: f32[8,128], index: 1, kind: input, shape index: {}]
  %s2 = inlined_call_operand.vmem [shape: f32[8,128], index: 2, kind: input, shape index: {}]
  %s3 = inlined_call_operand.vmem [shape: f32[32,1,64], index: 3, kind: input, shape index: {}]
  %s4 = inlined_call_operand.hbm [shape: f32[2,128,256], index: 4, kind: input, shape index: {}]
  %s5 = inlined_call_operand.vmem [shape: f32[2,1,256], index: 5, kind: input, shape index: {}]
  %s6 = inlined_call_operand.vmem [shape: f32[64,128], index: 6, kind: input, shape index: {}]
  %s7 = inlined_call_operand.vmem [shape: f32[1,128], index: 7, kind: input, shape index: {}]
  %s8 = inlined_call_operand.vmem [shape: f32[1,256], index: 8, kind: input, shape index: {}]
  %s9 = inlined_call_operand.vmem [shape: f32[1,256], index: 9, kind: input, shape index: {}]
  %s10 = inlined_call_operand.hbm [shape: f32[8,8,128], index: 10, kind: output, shape index: {0}]
  %s11 = inlined_call_operand.vmem [shape: f32[8,128], index: 11, kind: output, shape index: {1}]
  %s12 = inlined_call_operand.vmem [shape: f32[8,128], index: 12, kind: output, shape index: {2}]
  %13 = xla_tuple %s10, %s11, %s12
  %s14 = sld [smem:[#allocation0]]
  $region93: #{_decoder_decode_impl.1} parent=0
    _
  %s16 = ssub.s32 1, %s14
  %s17 = scalar_select 0, %s16, %s14
  %s18 = sshll.u32 %s0, 4
  %s19 = int_to_ptr.vmem [resolvable:$true] %s18
  %21 = dma.vmem_to_smem %s19, 128, [#allocation3], [#allocation2]
  %22 = dma.done [#allocation2], 128
  %23 = sfence
  $region1: #{_decoder_decode_impl.1} parent=0
    #allocation4 [shape = 'u8[262144]{0}', space=vmem, size = 0x40000, scoped, tag = 'input window, operand 4, single buffered']
    #allocation5 [shape = 's32[2]{0}', space=sflag, size = 0x8, scoped, tag = 'scoped memory for _decoder_decode_impl.1']
    #allocation6 [shape = 's32[2]{0}', space=sflag, size = 0x8, scoped, tag = 'scoped memory for _decoder_decode_impl.1']
    #allocation7 [shape = 'u8[8192]{0}', space=vmem, size = 0x2000, scoped, tag = 'output window, operand 0']
    %24 = vsyncpa [#allocation5], 0
    %25 = vsyncpa [#allocation6], 0
    %s26 = scalar_lea.sflag [#allocation6], 1
    %27 = vsyncpa %s26, 0
    loop: start=0, step=1, limit=10
    $region2: #{_decoder_decode_impl.1} parent=1 // loop_pre_header
      _
    $region3: #{_decoder_decode_impl.1} parent=1 // loop_header
      %s29 = sphi 0, %s33
      %p30 = scmp.ge.s32.totalorder %s29, 10
      %s37 = sphi 0, %s37
      %s39 = sphi 0, %s37
      %s40 = sphi 0, %s39
      %s54 = sphi 0, %s40
      %s58 = sphi 0, %s58
      %s60 = sphi 0, %s58
      %s61 = sphi 0, %s60
      %s75 = sphi 0, %s61
      %s79 = sphi 0, %s79
      %s81 = sphi 0, %s79
      %s82 = sphi 0, %s81
      %s96 = sphi 0, %s82
      %s100 = sphi 0, %s100
      %s102 = sphi 0, %s100
      %s103 = sphi 0, %s102
      %s117 = sphi 0, %s103
      %s121 = sphi 0, %s121
      %s123 = sphi 0, %s121
      %s124 = sphi 0, %s123
      %s138 = sphi 0, %s124
      %s142 = sphi 0, %s142
      %s144 = sphi 0, %s142
      %s145 = sphi 0, %s144
      %s159 = sphi 0, %s145
      %s163 = sphi 0, %s163
      %s165 = sphi 0, %s163
      %s166 = sphi 0, %s165
      %s180 = sphi 0, %s166
      %s184 = sphi 0, %s184
      %s186 = sphi 0, %s184
      %s187 = sphi 0, %s186
      %s201 = sphi 0, %s187
      %s205 = sphi 0, %s205
      %s207 = sphi 0, %s205
      %s208 = sphi 0, %s207
      %s222 = sphi 0, %s208
      %s228 = sphi 0, %s230
      %s231 = sphi 0, %s228
      %s232 = sphi 0, %s231
      %s248 = sphi 0, %s232
      %s252 = sphi 0, %s252
      %s254 = sphi 0, %s252
      %s255 = sphi 0, %s254
      %s269 = sphi 0, %s255
      %s273 = sphi 0, %s273
      %s275 = sphi 0, %s273
      %s276 = sphi 0, %s275
      %s290 = sphi 0, %s276
    $region4: #{_decoder_decode_impl.1} parent=1 // loop_header_branch
      %32 = sbr.rel (%p30) target = $region8
    $region5: #{_decoder_decode_impl.1} parent=1 // loop_body
      %s34 = ssub.s32 %s29, 1
      %s35 = ssub.s32 %s29, 2
      %s36 = sadd.s32 %s29, 1
      %s38 = sadd.s32 %s37, 1
      %p41 = scmp.eq.s32.totalorder %s29, 7
      %p42 = scmp.ne.s32.totalorder %s37, %s39
      %p43 = scmp.eq.s32.totalorder %s29, 0
      %p44 = por %p42, %p43
      %p45 = scmp.ne.s32.totalorder %s37, %s39
      %p46 = scmp.eq.s32.totalorder %s34, 7
      %p47 = por %p45, %p46
      %p48 = scmp.ne.s32.totalorder %s39, %s40
      %p49 = scmp.eq.s32.totalorder %s34, 0
      %p50 = por %p48, %p49
      %p51 = scmp.ne.s32.totalorder %s39, %s40
      %p52 = scmp.eq.s32.totalorder %s35, 7
      %p53 = por %p51, %p52
      %p55 = scmp.ne.s32.totalorder %s40, %s54
      %p56 = scmp.eq.s32.totalorder %s35, 0
      %p57 = por %p55, %p56
      %s59 = sadd.s32 %s58, 1
      %p62 = scmp.eq.s32.totalorder %s29, 7
      %p63 = scmp.ne.s32.totalorder %s58, %s60
      %p64 = scmp.eq.s32.totalorder %s29, 0
      %p65 = por %p63, %p64
      %p66 = scmp.ne.s32.totalorder %s58, %s60
      %p67 = scmp.eq.s32.totalorder %s34, 7
      %p68 = por %p66, %p67
      %p69 = scmp.ne.s32.totalorder %s60, %s61
      %p70 = scmp.eq.s32.totalorder %s34, 0
      %p71 = por %p69, %p70
      %p72 = scmp.ne.s32.totalorder %s60, %s61
      %p73 = scmp.eq.s32.totalorder %s35, 7
      %p74 = por %p72, %p73
      %p76 = scmp.ne.s32.totalorder %s61, %s75
      %p77 = scmp.eq.s32.totalorder %s35, 0
      %p78 = por %p76, %p77
      %s80 = sadd.s32 %s79, 1
      %p83 = scmp.eq.s32.totalorder %s29, 7
      %p84 = scmp.ne.s32.totalorder %s79, %s81
      %p85 = scmp.eq.s32.totalorder %s29, 0
      %p86 = por %p84, %p85
      %p87 = scmp.ne.s32.totalorder %s79, %s81
      %p88 = scmp.eq.s32.totalorder %s34, 7
      %p89 = por %p87, %p88
      %p90 = scmp.ne.s32.totalorder %s81, %s82
      %p91 = scmp.eq.s32.totalorder %s34, 0
      %p92 = por %p90, %p91
      %p93 = scmp.ne.s32.totalorder %s81, %s82
      %p94 = scmp.eq.s32.totalorder %s35, 7
      %p95 = por %p93, %p94
      %p97 = scmp.ne.s32.totalorder %s82, %s96
      %p98 = scmp.eq.s32.totalorder %s35, 0
      %p99 = por %p97, %p98
      %s101 = sadd.s32 %s100, 1
      %p104 = scmp.eq.s32.totalorder %s29, 7
      %p105 = scmp.ne.s32.totalorder %s100, %s102
      %p106 = scmp.eq.s32.totalorder %s29, 0
      %p107 = por %p105, %p106
      %p108 = scmp.ne.s32.totalorder %s100, %s102
      %p109 = scmp.eq.s32.totalorder %s34, 7
      %p110 = por %p108, %p109
      %p111 = scmp.ne.s32.totalorder %s102, %s103
      %p112 = scmp.eq.s32.totalorder %s34, 0
      %p113 = por %p111, %p112
      %p114 = scmp.ne.s32.totalorder %s102, %s103
      %p115 = scmp.eq.s32.totalorder %s35, 7
      %p116 = por %p114, %p115
      %p118 = scmp.ne.s32.totalorder %s103, %s117
      %p119 = scmp.eq.s32.totalorder %s35, 0
      %p120 = por %p118, %p119
      %s122 = sadd.s32 %s121, 1
      %p125 = scmp.eq.s32.totalorder %s29, 7
      %p126 = scmp.ne.s32.totalorder %s121, %s123
      %p127 = scmp.eq.s32.totalorder %s29, 0
      %p128 = por %p126, %p127
      %p129 = scmp.ne.s32.totalorder %s121, %s123
      %p130 = scmp.eq.s32.totalorder %s34, 7
      %p131 = por %p129, %p130
      %p132 = scmp.ne.s32.totalorder %s123, %s124
      %p133 = scmp.eq.s32.totalorder %s34, 0
      %p134 = por %p132, %p133
      %p135 = scmp.ne.s32.totalorder %s123, %s124
      %p136 = scmp.eq.s32.totalorder %s35, 7
      %p137 = por %p135, %p136
      %p139 = scmp.ne.s32.totalorder %s124, %s138
      %p140 = scmp.eq.s32.totalorder %s35, 0
      %p141 = por %p139, %p140
      %s143 = sadd.s32 %s142, 1
      %p146 = scmp.eq.s32.totalorder %s29, 7
      %p147 = scmp.ne.s32.totalorder %s142, %s144
      %p148 = scmp.eq.s32.totalorder %s29, 0
      %p149 = por %p147, %p148
      %p150 = scmp.ne.s32.totalorder %s142, %s144
      %p151 = scmp.eq.s32.totalorder %s34, 7
      %p152 = por %p150, %p151
      %p153 = scmp.ne.s32.totalorder %s144, %s145
      %p154 = scmp.eq.s32.totalorder %s34, 0
      %p155 = por %p153, %p154
      %p156 = scmp.ne.s32.totalorder %s144, %s145
      %p157 = scmp.eq.s32.totalorder %s35, 7
      %p158 = por %p156, %p157
      %p160 = scmp.ne.s32.totalorder %s145, %s159
      %p161 = scmp.eq.s32.totalorder %s35, 0
      %p162 = por %p160, %p161
      %s164 = sadd.s32 %s163, 1
      %p167 = scmp.eq.s32.totalorder %s29, 7
      %p168 = scmp.ne.s32.totalorder %s163, %s165
      %p169 = scmp.eq.s32.totalorder %s29, 0
      %p170 = por %p168, %p169
      %p171 = scmp.ne.s32.totalorder %s163, %s165
      %p172 = scmp.eq.s32.totalorder %s34, 7
      %p173 = por %p171, %p172
      %p174 = scmp.ne.s32.totalorder %s165, %s166
      %p175 = scmp.eq.s32.totalorder %s34, 0
      %p176 = por %p174, %p175
      %p177 = scmp.ne.s32.totalorder %s165, %s166
      %p178 = scmp.eq.s32.totalorder %s35, 7
      %p179 = por %p177, %p178
      %p181 = scmp.ne.s32.totalorder %s166, %s180
      %p182 = scmp.eq.s32.totalorder %s35, 0
      %p183 = por %p181, %p182
      %s185 = sadd.s32 %s184, 1
      %p188 = scmp.eq.s32.totalorder %s29, 7
      %p189 = scmp.ne.s32.totalorder %s184, %s186
      %p190 = scmp.eq.s32.totalorder %s29, 0
      %p191 = por %p189, %p190
      %p192 = scmp.ne.s32.totalorder %s184, %s186
      %p193 = scmp.eq.s32.totalorder %s34, 7
      %p194 = por %p192, %p193
      %p195 = scmp.ne.s32.totalorder %s186, %s187
      %p196 = scmp.eq.s32.totalorder %s34, 0
      %p197 = por %p195, %p196
      %p198 = scmp.ne.s32.totalorder %s186, %s187
      %p199 = scmp.eq.s32.totalorder %s35, 7
      %p200 = por %p198, %p199
      %p202 = scmp.ne.s32.totalorder %s187, %s201
      %p203 = scmp.eq.s32.totalorder %s35, 0
      %p204 = por %p202, %p203
      %s206 = sadd.s32 %s205, 1
      %p209 = scmp.eq.s32.totalorder %s29, 7
      %p210 = scmp.ne.s32.totalorder %s205, %s207
      %p211 = scmp.eq.s32.totalorder %s29, 0
      %p212 = por %p210, %p211
      %p213 = scmp.ne.s32.totalorder %s205, %s207
      %p214 = scmp.eq.s32.totalorder %s34, 7
      %p215 = por %p213, %p214
      %p216 = scmp.ne.s32.totalorder %s207, %s208
      %p217 = scmp.eq.s32.totalorder %s34, 0
      %p218 = por %p216, %p217
      %p219 = scmp.ne.s32.totalorder %s207, %s208
      %p220 = scmp.eq.s32.totalorder %s35, 7
      %p221 = por %p219, %p220
      %p223 = scmp.ne.s32.totalorder %s208, %s222
      %p224 = scmp.eq.s32.totalorder %s35, 0
      %p225 = por %p223, %p224
      %s226 = ssub.s32 %s29, %s36
      %p227 = scmp.eq.s32.totalorder %s226, 0
      %s229 = sadd.s32 %s228, 1
      %s230 = scalar_select %p227, %s228, %s229
      %p233 = pneg %p227
      %p234 = scmp.eq.s32.totalorder %s29, 7
      %p235 = por %p233, %p234
      %p236 = scmp.ne.s32.totalorder %s228, %s231
      %p237 = scmp.eq.s32.totalorder %s29, 0
      %p238 = por %p236, %p237
      %p239 = scmp.ne.s32.totalorder %s228, %s231
      %p240 = scmp.eq.s32.totalorder %s34, 7
      %p241 = por %p239, %p240
      %p242 = scmp.ne.s32.totalorder %s231, %s232
      %p243 = scmp.eq.s32.totalorder %s34, 0
      %p244 = por %p242, %p243
      %p245 = scmp.ne.s32.totalorder %s231, %s232
      %p246 = scmp.eq.s32.totalorder %s35, 7
      %p247 = por %p245, %p246
      %p249 = scmp.ne.s32.totalorder %s232, %s248
      %p250 = scmp.eq.s32.totalorder %s35, 0
      %p251 = por %p249, %p250
      %s253 = sadd.s32 %s252, 1
      %p256 = scmp.eq.s32.totalorder %s29, 7
      %p257 = scmp.ne.s32.totalorder %s252, %s254
      %p258 = scmp.eq.s32.totalorder %s29, 0
      %p259 = por %p257, %p258
      %p260 = scmp.ne.s32.totalorder %s252, %s254
      %p261 = scmp.eq.s32.totalorder %s34, 7
      %p262 = por %p260, %p261
      %p263 = scmp.ne.s32.totalorder %s254, %s255
      %p264 = scmp.eq.s32.totalorder %s34, 0
      %p265 = por %p263, %p264
      %p266 = scmp.ne.s32.totalorder %s254, %s255
      %p267 = scmp.eq.s32.totalorder %s35, 7
      %p268 = por %p266, %p267
      %p270 = scmp.ne.s32.totalorder %s255, %s269
      %p271 = scmp.eq.s32.totalorder %s35, 0
      %p272 = por %p270, %p271
      %s274 = sadd.s32 %s273, 1
      %p277 = scmp.eq.s32.totalorder %s29, 7
      %p278 = scmp.ne.s32.totalorder %s273, %s275
      %p279 = scmp.eq.s32.totalorder %s29, 0
      %p280 = por %p278, %p279
      %p281 = scmp.ne.s32.totalorder %s273, %s275
      %p282 = scmp.eq.s32.totalorder %s34, 7
      %p283 = por %p281, %p282
      %p284 = scmp.ne.s32.totalorder %s275, %s276
      %p285 = scmp.eq.s32.totalorder %s34, 0
      %p286 = por %p284, %p285
      %p287 = scmp.ne.s32.totalorder %s275, %s276
      %p288 = scmp.eq.s32.totalorder %s35, 7
      %p289 = por %p287, %p288
      %p291 = scmp.ne.s32.totalorder %s276, %s290
      %p292 = scmp.eq.s32.totalorder %s35, 0
      %p293 = por %p291, %p292
      %p294 = scmp.le.s32.totalorder 1, %s29
      %p295 = scmp.lt.s32.totalorder %s29, 9
      %p296 = pnand %p294, %p295
      %p297 = pneg %p296
      // Predicated region
      $region9: #{_decoder_decode_impl.1} parent=5 // pred_check
        _
      $region10: #{_decoder_decode_impl.1} parent=5 // pred_check_branch
        %299 = sbr.rel (%p296) target = $region12
      $region11: #{_decoder_decode_impl.1} parent=5 // pred_region
        %s300 = ssub.s32 %s29, 1
        // Predicated region
        $region13: #{_decoder_decode_impl.1} parent=11 // pred_check
          %p301 = pneg %p50
        $region14: #{_decoder_decode_impl.1} parent=11 // pred_check_branch
          %303 = sbr.rel (%p301) target = $region16
        $region15: #{_decoder_decode_impl.1} parent=11 // pred_region
          _
        $region16: #{_decoder_decode_impl.1} parent=11 // pred_fallthru
          _
        // Predicated region
        $region17: #{_decoder_decode_impl.1} parent=11 // pred_check
          %p304 = pneg %p71
        $region18: #{_decoder_decode_impl.1} parent=11 // pred_check_branch
          %306 = sbr.rel (%p304) target = $region20
        $region19: #{_decoder_decode_impl.1} parent=11 // pred_region
          _
        $region20: #{_decoder_decode_impl.1} parent=11 // pred_fallthru
          _
        // Predicated region
        $region21: #{_decoder_decode_impl.1} parent=11 // pred_check
          %p307 = pneg %p92
        $region22: #{_decoder_decode_impl.1} parent=11 // pred_check_branch
          %309 = sbr.rel (%p307) target = $region24
        $region23: #{_decoder_decode_impl.1} parent=11 // pred_region
          _
        $region24: #{_decoder_decode_impl.1} parent=11 // pred_fallthru
          _
        // Predicated region
        $region25: #{_decoder_decode_impl.1} parent=11 // pred_check
          %p310 = pneg %p113
        $region26: #{_decoder_decode_impl.1} parent=11 // pred_check_branch
          %312 = sbr.rel (%p310) target = $region28
        $region27: #{_decoder_decode_impl.1} parent=11 // pred_region
          %s314 = ssub.s32 8192, 8192
          %315 = vsyncadd [#allocation5], %s314
          %s316 = sshll.u32 [#allocation4], 4
          %s317 = int_to_ptr.vmem [resolvable:$true] %s316
          %322 = dma.hbm_to_vmem [thread:$0]  %s4, 8192, %s317, [#allocation5], 256, 256, 16
        $region28: #{_decoder_decode_impl.1} parent=11 // pred_fallthru
          _
        // Predicated region
        $region29: #{_decoder_decode_impl.1} parent=11 // pred_check
          %p323 = pneg %p134
        $region30: #{_decoder_decode_impl.1} parent=11 // pred_check_branch
          %325 = sbr.rel (%p323) target = $region32
        $region31: #{_decoder_decode_impl.1} parent=11 // pred_region
          _
        $region32: #{_decoder_decode_impl.1} parent=11 // pred_fallthru
          _
        // Predicated region
        $region33: #{_decoder_decode_impl.1} parent=11 // pred_check
          %p326 = pneg %p155
        $region34: #{_decoder_decode_impl.1} parent=11 // pred_check_branch
          %328 = sbr.rel (%p326) target = $region36
        $region35: #{_decoder_decode_impl.1} parent=11 // pred_region
          _
        $region36: #{_decoder_decode_impl.1} parent=11 // pred_fallthru
          _
        // Predicated region
        $region37: #{_decoder_decode_impl.1} parent=11 // pred_check
          %p329 = pneg %p176
        $region38: #{_decoder_decode_impl.1} parent=11 // pred_check_branch
          %331 = sbr.rel (%p329) target = $region40
        $region39: #{_decoder_decode_impl.1} parent=11 // pred_region
          _
        $region40: #{_decoder_decode_impl.1} parent=11 // pred_fallthru
          _
        // Predicated region
        $region41: #{_decoder_decode_impl.1} parent=11 // pred_check
          %p332 = pneg %p197
        $region42: #{_decoder_decode_impl.1} parent=11 // pred_check_branch
          %334 = sbr.rel (%p332) target = $region44
        $region43: #{_decoder_decode_impl.1} parent=11 // pred_region
          _
        $region44: #{_decoder_decode_impl.1} parent=11 // pred_fallthru
          _
        // Predicated region
        $region45: #{_decoder_decode_impl.1} parent=11 // pred_check
          %p335 = pneg %p218
        $region46: #{_decoder_decode_impl.1} parent=11 // pred_check_branch
          %337 = sbr.rel (%p335) target = $region48
        $region47: #{_decoder_decode_impl.1} parent=11 // pred_region
          _
        $region48: #{_decoder_decode_impl.1} parent=11 // pred_fallthru
          _
      $region12: #{_decoder_decode_impl.1} parent=5 // pred_fallthru
        _
      %p338 = scmp.lt.s32.totalorder %s29, 8
      // Predicated region
      $region49: #{_decoder_decode_impl.1} parent=5 // pred_check
        %p339 = pneg %p338
      $region50: #{_decoder_decode_impl.1} parent=5 // pred_check_branch
        %341 = sbr.rel (%p339) target = $region52
      $region51: #{_decoder_decode_impl.1} parent=5 // pred_region
        _
      $region52: #{_decoder_decode_impl.1} parent=5 // pred_fallthru
        _
      %p342 = scmp.le.s32.totalorder 1, %s29
      %p343 = scmp.lt.s32.totalorder %s29, 9
      %p344 = pnand %p342, %p343
      %p345 = pneg %p344
      // Predicated region
      $region53: #{_decoder_decode_impl.1} parent=5 // pred_check
        _
      $region54: #{_decoder_decode_impl.1} parent=5 // pred_check_branch
        %347 = sbr.rel (%p344) target = $region56
      $region55: #{_decoder_decode_impl.1} parent=5 // pred_region
        %s348 = ssub.s32 %s29, 1
        // Predicated region
        $region57: #{_decoder_decode_impl.1} parent=55 // pred_check
          %p349 = pneg %p113
        $region58: #{_decoder_decode_impl.1} parent=55 // pred_check_branch
          %351 = sbr.rel (%p349) target = $region60
        $region59: #{_decoder_decode_impl.1} parent=55 // pred_region
          %352 = dma.done [#allocation5], 8192
        $region60: #{_decoder_decode_impl.1} parent=55 // pred_fallthru
          _
        %p353 = pneg %p50
        %p354 = pneg %p47
        %p355 = pneg %p71
        %p356 = pneg %p68
        %p357 = pneg %p92
        %p358 = pneg %p89
        %p359 = pneg %p113
        %p360 = pneg %p110
        %p361 = pneg %p134
        %p362 = pneg %p131
        %p363 = pneg %p155
        %p364 = pneg %p152
        %p365 = pneg %p176
        %p366 = pneg %p173
        %p367 = pneg %p197
        %p368 = pneg %p194
        %p369 = pneg %p218
        %p370 = pneg %p215
        %p371 = pneg %p244
        %p372 = pneg %p241
        %s373 = sand.u32 %s231, 1
        %s374 = scalar_lea.sflag [#allocation6], %s373
        %s375 = sand.u32 %s231, 1
        %s376 = smul.addr %s375, 8
        %s377 = scalar_lea.vmem [#allocation7], %s376
        %p378 = pneg %p265
        %p379 = pneg %p262
        %p380 = pneg %p286
        %p381 = pneg %p283
        %p382 = scmp.eq.s32.totalorder %s34, 0
        // Predicated region
        $region61: #{_decoder_decode_impl.1} parent=55 // pred_check
          %p383 = pneg %p382
        $region62: #{_decoder_decode_impl.1} parent=55 // pred_check_branch
          %385 = sbr.rel (%p383) target = $region64
        $region63: #{_decoder_decode_impl.1} parent=55 // pred_region
          %v386 = vld [vmem:[%s1] sm:$0xff]
          %387 = vst [vmem:[%s11] sm:$0xff] %v386
          %v388 = vld [vmem:[%s2] sm:$0xff]
          %389 = vst [vmem:[%s12] sm:$0xff] %v388
        $region64: #{_decoder_decode_impl.1} parent=55 // pred_fallthru
          _
        %s390 = smul.u32 %s34, 128
        %s391 = sld [smem:[#allocation3 + %s390]]
        %s392 = scalar_lea.vmem %s3, %s391
        %v393 = vld [vmem:[%s392] sm:$0x1]
        %s394 = sadd.s32 %s390, 1
        %s395 = sld [smem:[#allocation3 + %s394]]
        %s396 = scalar_lea.vmem %s3, %s395
        %v397 = vld [vmem:[%s396] sm:$0x1]
        %s398 = sadd.s32 %s390, 2
        %s399 = sld [smem:[#allocation3 + %s398]]
        %s400 = scalar_lea.vmem %s3, %s399
        %v401 = vld [vmem:[%s400] sm:$0x1]
        %s402 = sadd.s32 %s390, 3
        %s403 = sld [smem:[#allocation3 + %s402]]
        %s404 = scalar_lea.vmem %s3, %s403
        %v405 = vld [vmem:[%s404] sm:$0x1]
        %s406 = sadd.s32 %s390, 4
        %s407 = sld [smem:[#allocation3 + %s406]]
        %s408 = scalar_lea.vmem %s3, %s407
        %v409 = vld [vmem:[%s408] sm:$0x1]
        %s410 = sadd.s32 %s390, 5
        %s411 = sld [smem:[#allocation3 + %s410]]
        %s412 = scalar_lea.vmem %s3, %s411
        %v413 = vld [vmem:[%s412] sm:$0x1]
        %s414 = sadd.s32 %s390, 6
        %s415 = sld [smem:[#allocation3 + %s414]]
        %s416 = scalar_lea.vmem %s3, %s415
        %v417 = vld [vmem:[%s416] sm:$0x1]
        %s418 = sadd.s32 %s390, 7
        %s419 = sld [smem:[#allocation3 + %s418]]
        %s420 = scalar_lea.vmem %s3, %s419
        %v421 = vld [vmem:[%s420] sm:$0x1]
        %v423 = vlaneseq
        %v424 = vshrl.u32 %v423, 7
        %v425 = vsub.s32 0, %v424
        %v426 = vrot.slane %v397, %v425
        %v429 = vlaneseq
        %v430 = vshrl.u32 %v429, 7
        %v431 = vsub.s32 0, %v430
        %v432 = vrot.slane %v401, %v431
        %v435 = vlaneseq
        %v436 = vshrl.u32 %v435, 7
        %v437 = vsub.s32 0, %v436
        %v438 = vrot.slane %v405, %v437
        %v441 = vlaneseq
        %v442 = vshrl.u32 %v441, 7
        %v443 = vsub.s32 0, %v442
        %v444 = vrot.slane %v409, %v443
        %v447 = vlaneseq
        %v448 = vshrl.u32 %v447, 7
        %v449 = vsub.s32 0, %v448
        %v450 = vrot.slane %v413, %v449
        %v453 = vlaneseq
        %v454 = vshrl.u32 %v453, 7
        %v455 = vsub.s32 0, %v454
        %v456 = vrot.slane %v417, %v455
        %v459 = vlaneseq
        %v460 = vshrl.u32 %v459, 7
        %v461 = vsub.s32 0, %v460
        %v462 = vrot.slane %v421, %v461
        %vm464 = vcmask 1040384
        %v465 = vsel %vm464, %v393, %v426
        %vm466 = vcmask 1041408
        %v467 = vsel %vm466, %v465, %v432
        %vm468 = vcmask 1042432
        %v469 = vsel %vm468, %v467, %v438
        %vm470 = vcmask 1043456
        %v471 = vsel %vm470, %v469, %v444
        %vm472 = vcmask 1044480
        %v473 = vsel %vm472, %v471, %v450
        %vm474 = vcmask 1045504
        %v475 = vsel %vm474, %v473, %v456
        %vm476 = vcmask 1046528
        %v477 = vsel %vm476, %v475, %v462
        %v478 = vld [vmem:[%s8] sm:$0x3]
        %v479 = vld [vmem:[%s9] sm:$0x3]
        %v480 = vld [vmem:[%s11] sm:$0xff]
        %v481 = vld [vmem:[%s12] sm:$0xff]
        %483 = vrot.lane.b32.xlu0 %v480, 64
        %v484 = vpop.permute.xlu0 %483
        %vm486 = vcmask 523264
        %v487 = vsel %vm486, %v477, %v484
        %v488 = vld [vmem:[#allocation4] sm:$0xff]
        %v489 = vld [vmem:[#allocation4 + $0x8] sm:$0xff]
        %v490 = vld [vmem:[#allocation4 + $0x10] sm:$0xff]
        %v491 = vld [vmem:[#allocation4 + $0x18] sm:$0xff]
        %v492 = vld [vmem:[#allocation4 + $0x20] sm:$0xff]
        %v493 = vld [vmem:[#allocation4 + $0x28] sm:$0xff]
        %v494 = vld [vmem:[#allocation4 + $0x30] sm:$0xff]
        %v495 = vld [vmem:[#allocation4 + $0x38] sm:$0xff]
        %v496 = vld [vmem:[#allocation4 + $0x40] sm:$0xff]
        %v497 = vld [vmem:[#allocation4 + $0x48] sm:$0xff]
        %v498 = vld [vmem:[#allocation4 + $0x50] sm:$0xff]
        %v499 = vld [vmem:[#allocation4 + $0x58] sm:$0xff]
        %v500 = vld [vmem:[#allocation4 + $0x60] sm:$0xff]
        %v501 = vld [vmem:[#allocation4 + $0x68] sm:$0xff]
        %v502 = vld [vmem:[#allocation4 + $0x70] sm:$0xff]
        %v503 = vld [vmem:[#allocation4 + $0x78] sm:$0xff]
        %v504 = vld [vmem:[#allocation4 + $0x80] sm:$0xff]
        %v505 = vld [vmem:[#allocation4 + $0x88] sm:$0xff]
        %v506 = vld [vmem:[#allocation4 + $0x90] sm:$0xff]
        %v507 = vld [vmem:[#allocation4 + $0x98] sm:$0xff]
        %v508 = vld [vmem:[#allocation4 + $0xa0] sm:$0xff]
        %v509 = vld [vmem:[#allocation4 + $0xa8] sm:$0xff]
        %v510 = vld [vmem:[#allocation4 + $0xb0] sm:$0xff]
        %v511 = vld [vmem:[#allocation4 + $0xb8] sm:$0xff]
        %v512 = vld [vmem:[#allocation4 + $0xc0] sm:$0xff]
        %v513 = vld [vmem:[#allocation4 + $0xc8] sm:$0xff]
        %v514 = vld [vmem:[#allocation4 + $0xd0] sm:$0xff]
        %v515 = vld [vmem:[#allocation4 + $0xd8] sm:$0xff]
        %v516 = vld [vmem:[#allocation4 + $0xe0] sm:$0xff]
        %v517 = vld [vmem:[#allocation4 + $0xe8] sm:$0xff]
        %v518 = vld [vmem:[#allocation4 + $0xf0] sm:$0xff]
        %v519 = vld [vmem:[#allocation4 + $0xf8] sm:$0xff]
        %v520 = vld [vmem:[%s5] sm:$0x3]
        %v522 = vlaneseq
        %v523 = vshrl.u32 %v522, 7
        %v524 = vsub.s32 0, %v523
        %v525 = vrot.slane %v520, %v524
        %v526 = vlaneseq
        %v527 = vshrl.u32 %v526, 7
        %v528 = vsub.s32 1, %v527
        %v529 = vrot.slane %v520, %v528
        %532 = vmatprep.subr.mxu0 %v519
        %533 = vmatpush1.msra.mxu0 %v518
        %534 = vmatprep.subr.mxu0 %v517
        %535 = vmatpush1.msra.mxu0 %v516
        %536 = vmatprep.subr.mxu0 %v515
        %537 = vmatpush1.msra.mxu0 %v514
        %538 = vmatprep.subr.mxu0 %v513
        %539 = vmatpush1.msra.mxu0 %v512
        %540 = vmatprep.subr.mxu0 %v511
        %541 = vmatpush1.msra.mxu0 %v510
        %542 = vmatprep.subr.mxu0 %v509
        %543 = vmatpush1.msra.mxu0 %v508
        %544 = vmatprep.subr.mxu0 %v507
        %545 = vmatpush1.msra.mxu0 %v506
        %546 = vmatprep.subr.mxu0 %v505
        %547 = vmatpush1.msra.mxu0 %v504
        %548 = vmatprep.subr.mxu0 %v503
        %549 = vmatpush1.msra.mxu0 %v502
        %550 = vmatprep.subr.mxu0 %v501
        %551 = vmatpush1.msra.mxu0 %v500
        %552 = vmatprep.subr.mxu0 %v499
        %553 = vmatpush1.msra.mxu0 %v498
        %554 = vmatprep.subr.mxu0 %v497
        %555 = vmatpush1.msra.mxu0 %v496
        %556 = vmatprep.subr.mxu0 %v495
        %557 = vmatpush1.msra.mxu0 %v494
        %558 = vmatprep.subr.mxu0 %v493
        %559 = vmatpush1.msra.mxu0 %v492
        %560 = vmatprep.subr.mxu0 %v491
        %561 = vmatpush1.msra.mxu0 %v490
        %562 = vmatprep.subr.mxu0 %v489
        %563 = vmatpush1.msra.mxu0 %v488
        %564 = vmatprep.subr.mxu0 0.0
        %565 = vmatpush2.msra.mxu0 0.0
        %566 = vmatprep.subr.mxu0 0.0
        %567 = vmatpush2.msra.mxu0 0.0
        %568 = vmatprep.subr.mxu0 0.0
        %569 = vmatpush2.msra.mxu0 0.0
        %570 = vmatprep.subr.mxu0 0.0
        %571 = vmatpush2.msra.mxu0 0.0
        %572 = vmatprep.subr.mxu0 0.0
        %573 = vmatpush2.msra.mxu0 0.0
        %574 = vmatprep.subr.mxu0 0.0
        %575 = vmatpush2.msra.mxu0 0.0
        %576 = vmatprep.subr.mxu0 0.0
        %577 = vmatpush2.msra.mxu0 0.0
        %578 = vmatprep.subr.mxu0 0.0
        %579 = vmatpush2.msra.mxu0 0.0
        %580 = vmatprep.subr.mxu0 0.0
        %581 = vmatpush2.msra.mxu0 0.0
        %582 = vmatprep.subr.mxu0 0.0
        %583 = vmatpush2.msra.mxu0 0.0
        %584 = vmatprep.subr.mxu0 0.0
        %585 = vmatpush2.msra.mxu0 0.0
        %586 = vmatprep.subr.mxu0 0.0
        %587 = vmatpush2.msra.mxu0 0.0
        %588 = vmatprep.subr.mxu0 0.0
        %589 = vmatpush2.msra.mxu0 0.0
        %590 = vmatprep.subr.mxu0 0.0
        %591 = vmatpush2.msra.mxu0 0.0
        %592 = vmatprep.subr.mxu0 0.0
        %593 = vmatpush2.msra.mxu0 0.0
        %594 = vmatprep.subr.mxu0 0.0
        %595 = vmatpush2.msra.mxu0 0.0
        %596 = vmatprep.mubr.f32.mxu0 0.0
        %597 = vmatmul.mubr.f32.gmra.mxu0 %v487
        %v598 = vpop.f32.mrf.mxu0
        %v599 = vadd.f32 %v525, %v598
        %v600 = vpop.f32.mrf.mxu0
        %v601 = vadd.f32 %v529, %v600
        %602 = vdwg.mxu0
        %v604 = vlaneseq
        %v605 = vshrl.u32 %v604, 7
        %v606 = vsub.s32 0, %v605
        %v607 = vrot.slane %v478, %v606
        %v608 = vlaneseq
        %v609 = vshrl.u32 %v608, 7
        %v610 = vsub.s32 1, %v609
        %v611 = vrot.slane %v478, %v610
        %v614 = vmul.f32 %v599, %v607
        %v615 = vmul.f32 %v601, %v611
        %v616 = vtanh.pop %v614
        %v617 = vtanh.pop %v615
        %v618 = vmul.f32 %v616, %v607
        %v619 = vmul.f32 %v617, %v611
        %v621 = vlaneseq
        %v622 = vshrl.u32 %v621, 7
        %v623 = vsub.s32 0, %v622
        %v624 = vrot.slane %v479, %v623
        %v625 = vlaneseq
        %v626 = vshrl.u32 %v625, 7
        %v627 = vsub.s32 1, %v626
        %v628 = vrot.slane %v479, %v627
        %v631 = vadd.f32 %v618, %v624
        %v632 = vadd.f32 %v619, %v628
        %634 = vrot.lane.b32.xlu0 %v481, 64
        %v635 = vpop.permute.xlu0 %634
        %v637 = vmul.f32 %v631, %v635
        %v638 = vmul.f32 %v631, %v632
        %640 = vrot.lane.b32.xlu0 %v638, 64
        %v641 = vpop.permute.xlu0 %640
        %v643 = vadd.f32 %v637, %v641
        %v644 = vtanh.pop %v643
        %v645 = vmul.f32 %v632, %v644
        %647 = vrot.lane.b32.xlu0 %v645, 64
        %v648 = vpop.permute.xlu0 %647
        %v650 = vsel %vm486, %v648, %v480
        %s651 = scalar_lea.vmem [#allocation4], 256
        %v652 = vld [vmem:[%s651] sm:$0xff]
        %v653 = vld [vmem:[%s651 + $0x8] sm:$0xff]
        %v654 = vld [vmem:[%s651 + $0x10] sm:$0xff]
        %v655 = vld [vmem:[%s651 + $0x18] sm:$0xff]
        %v656 = vld [vmem:[%s651 + $0x20] sm:$0xff]
        %v657 = vld [vmem:[%s651 + $0x28] sm:$0xff]
        %v658 = vld [vmem:[%s651 + $0x30] sm:$0xff]
        %v659 = vld [vmem:[%s651 + $0x38] sm:$0xff]
        %v660 = vld [vmem:[%s651 + $0x40] sm:$0xff]
        %v661 = vld [vmem:[%s651 + $0x48] sm:$0xff]
        %v662 = vld [vmem:[%s651 + $0x50] sm:$0xff]
        %v663 = vld [vmem:[%s651 + $0x58] sm:$0xff]
        %v664 = vld [vmem:[%s651 + $0x60] sm:$0xff]
        %v665 = vld [vmem:[%s651 + $0x68] sm:$0xff]
        %v666 = vld [vmem:[%s651 + $0x70] sm:$0xff]
        %v667 = vld [vmem:[%s651 + $0x78] sm:$0xff]
        %v668 = vld [vmem:[%s651 + $0x80] sm:$0xff]
        %v669 = vld [vmem:[%s651 + $0x88] sm:$0xff]
        %v670 = vld [vmem:[%s651 + $0x90] sm:$0xff]
        %v671 = vld [vmem:[%s651 + $0x98] sm:$0xff]
        %v672 = vld [vmem:[%s651 + $0xa0] sm:$0xff]
        %v673 = vld [vmem:[%s651 + $0xa8] sm:$0xff]
        %v674 = vld [vmem:[%s651 + $0xb0] sm:$0xff]
        %v675 = vld [vmem:[%s651 + $0xb8] sm:$0xff]
        %v676 = vld [vmem:[%s651 + $0xc0] sm:$0xff]
        %v677 = vld [vmem:[%s651 + $0xc8] sm:$0xff]
        %v678 = vld [vmem:[%s651 + $0xd0] sm:$0xff]
        %v679 = vld [vmem:[%s651 + $0xd8] sm:$0xff]
        %v680 = vld [vmem:[%s651 + $0xe0] sm:$0xff]
        %v681 = vld [vmem:[%s651 + $0xe8] sm:$0xff]
        %v682 = vld [vmem:[%s651 + $0xf0] sm:$0xff]
        %v683 = vld [vmem:[%s651 + $0xf8] sm:$0xff]
        %s684 = scalar_lea.vmem %s5, 2
        %v685 = vld [vmem:[%s684] sm:$0x3]
        %v687 = vlaneseq
        %v688 = vshrl.u32 %v687, 7
        %v689 = vsub.s32 0, %v688
        %v690 = vrot.slane %v685, %v689
        %v691 = vlaneseq
        %v692 = vshrl.u32 %v691, 7
        %v693 = vsub.s32 1, %v692
        %v694 = vrot.slane %v685, %v693
        %697 = vmatprep.subr.mxu0 %v683
        %698 = vmatpush1.msra.mxu0 %v682
        %699 = vmatprep.subr.mxu0 %v681
        %700 = vmatpush1.msra.mxu0 %v680
        %701 = vmatprep.subr.mxu0 %v679
        %702 = vmatpush1.msra.mxu0 %v678
        %703 = vmatprep.subr.mxu0 %v677
        %704 = vmatpush1.msra.mxu0 %v676
        %705 = vmatprep.subr.mxu0 %v675
        %706 = vmatpush1.msra.mxu0 %v674
        %707 = vmatprep.subr.mxu0 %v673
        %708 = vmatpush1.msra.mxu0 %v672
        %709 = vmatprep.subr.mxu0 %v671
        %710 = vmatpush1.msra.mxu0 %v670
        %711 = vmatprep.subr.mxu0 %v669
        %712 = vmatpush1.msra.mxu0 %v668
        %713 = vmatprep.subr.mxu0 %v667
        %714 = vmatpush1.msra.mxu0 %v666
        %715 = vmatprep.subr.mxu0 %v665
        %716 = vmatpush1.msra.mxu0 %v664
        %717 = vmatprep.subr.mxu0 %v663
        %718 = vmatpush1.msra.mxu0 %v662
        %719 = vmatprep.subr.mxu0 %v661
        %720 = vmatpush1.msra.mxu0 %v660
        %721 = vmatprep.subr.mxu0 %v659
        %722 = vmatpush1.msra.mxu0 %v658
        %723 = vmatprep.subr.mxu0 %v657
        %724 = vmatpush1.msra.mxu0 %v656
        %725 = vmatprep.subr.mxu0 %v655
        %726 = vmatpush1.msra.mxu0 %v654
        %727 = vmatprep.subr.mxu0 %v653
        %728 = vmatpush1.msra.mxu0 %v652
        %729 = vmatprep.subr.mxu0 0.0
        %730 = vmatpush2.msra.mxu0 0.0
        %731 = vmatprep.subr.mxu0 0.0
        %732 = vmatpush2.msra.mxu0 0.0
        %733 = vmatprep.subr.mxu0 0.0
        %734 = vmatpush2.msra.mxu0 0.0
        %735 = vmatprep.subr.mxu0 0.0
        %736 = vmatpush2.msra.mxu0 0.0
        %737 = vmatprep.subr.mxu0 0.0
        %738 = vmatpush2.msra.mxu0 0.0
        %739 = vmatprep.subr.mxu0 0.0
        %740 = vmatpush2.msra.mxu0 0.0
        %741 = vmatprep.subr.mxu0 0.0
        %742 = vmatpush2.msra.mxu0 0.0
        %743 = vmatprep.subr.mxu0 0.0
        %744 = vmatpush2.msra.mxu0 0.0
        %745 = vmatprep.subr.mxu0 0.0
        %746 = vmatpush2.msra.mxu0 0.0
        %747 = vmatprep.subr.mxu0 0.0
        %748 = vmatpush2.msra.mxu0 0.0
        %749 = vmatprep.subr.mxu0 0.0
        %750 = vmatpush2.msra.mxu0 0.0
        %751 = vmatprep.subr.mxu0 0.0
        %752 = vmatpush2.msra.mxu0 0.0
        %753 = vmatprep.subr.mxu0 0.0
        %754 = vmatpush2.msra.mxu0 0.0
        %755 = vmatprep.subr.mxu0 0.0
        %756 = vmatpush2.msra.mxu0 0.0
        %757 = vmatprep.subr.mxu0 0.0
        %758 = vmatpush2.msra.mxu0 0.0
        %759 = vmatprep.subr.mxu0 0.0
        %760 = vmatpush2.msra.mxu0 0.0
        %761 = vmatprep.mubr.f32.mxu0 0.0
        %762 = vmatmul.mubr.f32.gmra.mxu0 %v650
        %v763 = vpop.f32.mrf.mxu0
        %v764 = vadd.f32 %v690, %v763
        %v765 = vpop.f32.mrf.mxu0
        %v766 = vadd.f32 %v694, %v765
        %767 = vdwg.mxu0
        %v768 = vmul.f32 %v764, %v607
        %v769 = vmul.f32 %v766, %v611
        %v770 = vtanh.pop %v768
        %v771 = vtanh.pop %v769
        %v772 = vmul.f32 %v770, %v607
        %v773 = vmul.f32 %v771, %v611
        %v774 = vadd.f32 %v772, %v624
        %v775 = vadd.f32 %v773, %v628
        %v776 = vmul.f32 %v774, %v481
        %v777 = vmul.f32 %v774, %v775
        %779 = vrot.lane.b32.xlu0 %v777, 64
        %v780 = vpop.permute.xlu0 %779
        %v782 = vadd.f32 %v776, %v780
        %v783 = vtanh.pop %v782
        %v784 = vmul.f32 %v775, %v783
        %v785 = vld [vmem:[%s6] sm:$0xff]
        %v786 = vld [vmem:[%s6 + $0x8] sm:$0xff]
        %v787 = vld [vmem:[%s6 + $0x10] sm:$0xff]
        %v788 = vld [vmem:[%s6 + $0x18] sm:$0xff]
        %v789 = vld [vmem:[%s6 + $0x20] sm:$0xff]
        %v790 = vld [vmem:[%s6 + $0x28] sm:$0xff]
        %v791 = vld [vmem:[%s6 + $0x30] sm:$0xff]
        %v792 = vld [vmem:[%s6 + $0x38] sm:$0xff]
        %v793 = vld [vmem:[%s7] sm:$0x1]
        %v795 = vlaneseq
        %v796 = vshrl.u32 %v795, 7
        %v797 = vsub.s32 0, %v796
        %v798 = vrot.slane %v793, %v797
        %801 = vrot.lane.b32.xlu0 %v784, 64
        %v802 = vpop.permute.xlu0 %801
        %v803 = vsel %vm486, %v802, 0
        %805 = vmatprep.subr.mxu0 0.0
        %806 = vmatpush1.msra.mxu0 0.0
        %807 = vmatprep.subr.mxu0 0.0
        %808 = vmatpush1.msra.mxu0 0.0
        %809 = vmatprep.subr.mxu0 0.0
        %810 = vmatpush1.msra.mxu0 0.0
        %811 = vmatprep.subr.mxu0 0.0
        %812 = vmatpush1.msra.mxu0 0.0
        %813 = vmatprep.subr.mxu0 0.0
        %814 = vmatpush1.msra.mxu0 0.0
        %815 = vmatprep.subr.mxu0 0.0
        %816 = vmatpush1.msra.mxu0 0.0
        %817 = vmatprep.subr.mxu0 0.0
        %818 = vmatpush1.msra.mxu0 0.0
        %819 = vmatprep.subr.mxu0 0.0
        %820 = vmatpush1.msra.mxu0 0.0
        %821 = vmatprep.subr.mxu0 0.0
        %822 = vmatpush1.msra.mxu0 %v792
        %823 = vmatprep.subr.mxu0 0.0
        %824 = vmatpush1.msra.mxu0 %v791
        %825 = vmatprep.subr.mxu0 0.0
        %826 = vmatpush1.msra.mxu0 %v790
        %827 = vmatprep.subr.mxu0 0.0
        %828 = vmatpush1.msra.mxu0 %v789
        %829 = vmatprep.subr.mxu0 0.0
        %830 = vmatpush1.msra.mxu0 %v788
        %831 = vmatprep.subr.mxu0 0.0
        %832 = vmatpush1.msra.mxu0 %v787
        %833 = vmatprep.subr.mxu0 0.0
        %834 = vmatpush1.msra.mxu0 %v786
        %835 = vmatprep.subr.mxu0 0.0
        %836 = vmatpush1.msra.mxu0 %v785
        %837 = vmatprep.subr.mxu0 0.0
        %838 = vmatpush2.msra.mxu0 0.0
        %839 = vmatprep.subr.mxu0 0.0
        %840 = vmatpush2.msra.mxu0 0.0
        %841 = vmatprep.subr.mxu0 0.0
        %842 = vmatpush2.msra.mxu0 0.0
        %843 = vmatprep.subr.mxu0 0.0
        %844 = vmatpush2.msra.mxu0 0.0
        %845 = vmatprep.subr.mxu0 0.0
        %846 = vmatpush2.msra.mxu0 0.0
        %847 = vmatprep.subr.mxu0 0.0
        %848 = vmatpush2.msra.mxu0 0.0
        %849 = vmatprep.subr.mxu0 0.0
        %850 = vmatpush2.msra.mxu0 0.0
        %851 = vmatprep.subr.mxu0 0.0
        %852 = vmatpush2.msra.mxu0 0.0
        %853 = vmatprep.subr.mxu0 0.0
        %854 = vmatpush2.msra.mxu0 0.0
        %855 = vmatprep.subr.mxu0 0.0
        %856 = vmatpush2.msra.mxu0 0.0
        %857 = vmatprep.subr.mxu0 0.0
        %858 = vmatpush2.msra.mxu0 0.0
        %859 = vmatprep.subr.mxu0 0.0
        %860 = vmatpush2.msra.mxu0 0.0
        %861 = vmatprep.subr.mxu0 0.0
        %862 = vmatpush2.msra.mxu0 0.0
        %863 = vmatprep.subr.mxu0 0.0
        %864 = vmatpush2.msra.mxu0 0.0
        %865 = vmatprep.subr.mxu0 0.0
        %866 = vmatpush2.msra.mxu0 0.0
        %867 = vmatprep.subr.mxu0 0.0
        %868 = vmatpush2.msra.mxu0 0.0
        %869 = vmatprep.mubr.f32.mxu0 0.0
        %870 = vmatmul.mubr.f32.gmra.mxu0 %v803
        %v871 = vpop.f32.mrf.mxu0
        %v872 = vadd.f32 %v798, %v871
        %v873 = vpop.f32.mrf.mxu0
        %874 = vdwg.mxu0
        %875 = vst [vmem:[%s377] sm:$0xff] %v872
        %v876 = vsel %vm486, %v648, %v784
        %877 = vst [vmem:[%s11] sm:$0xff] %v876
        %879 = vrot.lane.b32.xlu0 %v643, 64
        %v880 = vpop.permute.xlu0 %879
        %v882 = vsel %vm486, %v880, %v782
        %883 = vst [vmem:[%s12] sm:$0xff] %v882
        %s884 = sand.u32 %s231, 1
        %s885 = scalar_lea.sflag [#allocation6], %s884
        %s886 = sand.u32 %s231, 1
        %s887 = smul.addr %s886, 8
        %s888 = scalar_lea.vmem [#allocation7], %s887
        // Predicated region
        $region65: #{_decoder_decode_impl.1} parent=55 // pred_check
          %p889 = pneg %p241
        $region66: #{_decoder_decode_impl.1} parent=55 // pred_check_branch
          %891 = sbr.rel (%p889) target = $region68
        $region67: #{_decoder_decode_impl.1} parent=55 // pred_region
          %s893 = ssub.s32 128, 128
          %894 = vsyncadd %s885, %s893
          %s895 = smul.addr %s34, 128
          %s896 = scalar_lea.hbm %s10, %s895
          %s898 = sshll.u32 %s888, 4
          %s899 = int_to_ptr.vmem [resolvable:$true] %s898
          %901 = dma.vmem_to_hbm [thread:$0]  %s899, 128, %s896, %s885
        $region68: #{_decoder_decode_impl.1} parent=55 // pred_fallthru
          _
        // Predicated region
        $region69: #{_decoder_decode_impl.1} parent=55 // pred_check
          %p902 = pneg %p262
        $region70: #{_decoder_decode_impl.1} parent=55 // pred_check_branch
          %904 = sbr.rel (%p902) target = $region72
        $region71: #{_decoder_decode_impl.1} parent=55 // pred_region
          _
        $region72: #{_decoder_decode_impl.1} parent=55 // pred_fallthru
          _
        // Predicated region
        $region73: #{_decoder_decode_impl.1} parent=55 // pred_check
          %p905 = pneg %p283
        $region74: #{_decoder_decode_impl.1} parent=55 // pred_check_branch
          %907 = sbr.rel (%p905) target = $region76
        $region75: #{_decoder_decode_impl.1} parent=55 // pred_region
          _
        $region76: #{_decoder_decode_impl.1} parent=55 // pred_fallthru
          _
        // Predicated region
        $region77: #{_decoder_decode_impl.1} parent=55 // pred_check
          %p908 = pneg %p262
        $region78: #{_decoder_decode_impl.1} parent=55 // pred_check_branch
          %910 = sbr.rel (%p908) target = $region80
        $region79: #{_decoder_decode_impl.1} parent=55 // pred_region
          _
        $region80: #{_decoder_decode_impl.1} parent=55 // pred_fallthru
          _
        // Predicated region
        $region81: #{_decoder_decode_impl.1} parent=55 // pred_check
          %p911 = pneg %p283
        $region82: #{_decoder_decode_impl.1} parent=55 // pred_check_branch
          %913 = sbr.rel (%p911) target = $region84
        $region83: #{_decoder_decode_impl.1} parent=55 // pred_region
          _
        $region84: #{_decoder_decode_impl.1} parent=55 // pred_fallthru
          _
      $region56: #{_decoder_decode_impl.1} parent=5 // pred_fallthru
        _
      %p914 = scmp.le.s32.totalorder 2, %s29
      // Predicated region
      $region85: #{_decoder_decode_impl.1} parent=5 // pred_check
        %p915 = pneg %p914
      $region86: #{_decoder_decode_impl.1} parent=5 // pred_check_branch
        %917 = sbr.rel (%p915) target = $region88
      $region87: #{_decoder_decode_impl.1} parent=5 // pred_region
        %s918 = ssub.s32 %s29, 2
        // Predicated region
        $region89: #{_decoder_decode_impl.1} parent=87 // pred_check
          %p919 = pneg %p247
        $region90: #{_decoder_decode_impl.1} parent=87 // pred_check_branch
          %921 = sbr.rel (%p919) target = $region92
        $region91: #{_decoder_decode_impl.1} parent=87 // pred_region
          %s922 = sand.u32 %s232, 1
          %s923 = scalar_lea.sflag [#allocation6], %s922
          %s924 = sand.u32 %s232, 1
          %s925 = smul.addr %s924, 8
          %s926 = scalar_lea.vmem [#allocation7], %s925
          %927 = dma.done %s923, 128
        $region92: #{_decoder_decode_impl.1} parent=87 // pred_fallthru
          _
      $region88: #{_decoder_decode_impl.1} parent=5 // pred_fallthru
        _
    $region6: #{_decoder_decode_impl.1} parent=1 // loop_footer
      %s33 = sadd.s32 1, %s29
    $region7: #{_decoder_decode_impl.1} parent=1 // loop_footer_branch
      %28 = sbr.rel target = $region3
    $region8: #{_decoder_decode_impl.1} parent=1 // loop_exit
      _
    %928 = vsyncpa [#allocation5], 1
    %s929 = scalar_lea.sflag [#allocation5], 1
    %930 = vsyncpa %s929, 1
    %931 = vsyncpa [#allocation6], 1
    %s932 = scalar_lea.sflag [#allocation6], 1
    %933 = vsyncpa %s932, 1

</llo_original>
